<compile_context>
chip_gen: v5e
topology: v5e:2x2
jax: 0.10.0
libtpu: 0.0.40
codegen_flags: <defaults>
</compile_context>

<pallas_src>
import math
import jax
import jax.numpy as jnp
from jax.experimental import pallas as pl
from jax.experimental.pallas import tpu as pltpu

_LANE = 128     # TPU lane width: pad output feature dim to a multiple of this
_SUBLANE = 8    # f32 sublane granularity for the row tile


def _round_up(x, m):
    return (x + m - 1) // m * m


def fc_gelu_kernel(x_ref, w_ref, b_ref, o_ref):
    # x_ref: (TM, D_in)        bf16 (or f32)
    # w_ref: (D_in, D_out_pad) bf16 (or f32), resident across the grid
    # b_ref: (1, D_out_pad)    f32
    # o_ref: (TM, D_out_pad)   output dtype (lane-dense: D_out_pad % 128 == 0)
    y = jnp.dot(x_ref[...], w_ref[...], preferred_element_type=jnp.float32)
    y = y + b_ref[...]
    # Exact GELU (matches torch.nn.GELU default, approximate='none'), in f32.
    out = 0.5 * y * (1.0 + jax.lax.erf(y * (1.0 / math.sqrt(2.0))))
    o_ref[...] = out.astype(o_ref.dtype)


def fc_layers_forward(x, weight, bias, *, tile_m=512, use_bf16=True):
    """x: (N, D_in), weight: (D_out, D_in) PyTorch layout, bias: (D_out,)."""
    N, D_in = x.shape
    D_out = weight.shape[0]
    out_dtype = x.dtype

    # ---- lane-dense output: pad D_out up to a multiple of 128 --------------
    d_out_pad = _round_up(D_out, _LANE)

    # ---- row tile: explicit, multiple of 8, never larger than needed -------
    tile_m = max(_SUBLANE, _round_up(min(int(tile_m), _round_up(N, _SUBLANE)),
                                     _SUBLANE))
    n_pad = _round_up(N, tile_m)
    grid = (n_pad // tile_m,)

    # ---- wrapper-side layout plumbing (pad rows / features with zeros) -----
    compute_dtype = jnp.bfloat16 if use_bf16 else x.dtype
    x_p = jnp.zeros((n_pad, D_in), dtype=compute_dtype)
    x_p = x_p.at[:N, :].set(x.astype(compute_dtype))

    w_t = jnp.zeros((D_in, d_out_pad), dtype=compute_dtype)
    w_t = w_t.at[:, :D_out].set(weight.T.astype(compute_dtype))

    b2d = jnp.zeros((1, d_out_pad), dtype=jnp.float32)
    b2d = b2d.at[0, :D_out].set(bias.astype(jnp.float32))

    # Working set (double-buffered x / out blocks + resident W) is tiny at
    # these dims; 32 MiB scoped VMEM is safe on v5e/v6e/v7x alike.
    vmem_limit = 32 * 1024 * 1024

    out_padded = pl.pallas_call(
        fc_gelu_kernel,
        out_shape=jax.ShapeDtypeStruct((n_pad, d_out_pad), out_dtype),
        grid_spec=pltpu.PrefetchScalarGridSpec(
            num_scalar_prefetch=0,
            grid=grid,
            in_specs=[
                pl.BlockSpec((tile_m, D_in), lambda i: (i, 0)),
                pl.BlockSpec((D_in, d_out_pad), lambda i: (0, 0)),
                pl.BlockSpec((1, d_out_pad), lambda i: (0, 0)),
            ],
            out_specs=pl.BlockSpec((tile_m, d_out_pad), lambda i: (i, 0)),
        ),
        compiler_params=pltpu.CompilerParams(
            dimension_semantics=("parallel",),
            vmem_limit_bytes=vmem_limit,
        ),
    )(x_p, w_t, b2d)

    # TODO(synk): if D_in/D_out ever grow past VMEM-resident sizes, add K/N
    # grid axes with an f32 accumulator scratch (pl.when init/finalize).
    return out_padded[:N, :D_out]


def reference_forward(x, weight, bias):
    y = x @ weight.T + bias
    return 0.5 * y * (1.0 + jax.lax.erf(y / math.sqrt(2.0)))


if __name__ == "__main__":
    word_embedding_dim = 32
    item_embedding_dim = 64

    key = jax.random.PRNGKey(0)
    kx, kw, kx2 = jax.random.split(key, 3)

    # deterministic xavier_normal_ init of fc.weight: std = sqrt(2/(fan_in+fan_out))
    std = math.sqrt(2.0 / (word_embedding_dim + item_embedding_dim))
    weight = (jax.random.normal(kw, (item_embedding_dim, word_embedding_dim),
                                dtype=jnp.float32) * std)
    bias = jnp.zeros((item_embedding_dim,), dtype=jnp.float32)  # constant_(bias, 0)

    # --- case 1: toy batch ---------------------------------------------------
    N1 = 8
    x1 = jax.random.normal(kx, (N1, word_embedding_dim), dtype=jnp.float32)
    out1 = jax.block_until_ready(fc_layers_forward(x1, weight, bias))
    assert out1.shape == (N1, item_embedding_dim)

    # tight check vs reference run on bf16-quantized inputs (same quantization
    # as the kernel, f32 accumulation)
    ref1_q = reference_forward(
        x1.astype(jnp.bfloat16).astype(jnp.float32),
        weight.astype(jnp.bfloat16).astype(jnp.float32), bias)
    assert jnp.allclose(out1, ref1_q, atol=1e-4, rtol=1e-4), (
        f"max abs err vs bf16-quantized ref: {jnp.max(jnp.abs(out1 - ref1_q))}")

    # loose sanity check vs the full-f32 PyTorch-equivalent reference
    ref1 = reference_forward(x1, weight, bias)
    assert jnp.allclose(out1, ref1, atol=5e-2, rtol=5e-2), (
        f"max abs err vs f32 ref: {jnp.max(jnp.abs(out1 - ref1))}")

    # --- case 2: non-divisible batch, multi-step grid (exercise padding path) -
    N2 = 300
    x2 = jax.random.normal(kx2, (N2, word_embedding_dim), dtype=jnp.float32)
    out2 = jax.block_until_ready(
        fc_layers_forward(x2, weight, bias, tile_m=128))
    assert out2.shape == (N2, item_embedding_dim)
    ref2_q = reference_forward(
        x2.astype(jnp.bfloat16).astype(jnp.float32),
        weight.astype(jnp.bfloat16).astype(jnp.float32), bias)
    assert jnp.allclose(out2, ref2_q, atol=1e-4, rtol=1e-4), (
        f"max abs err vs bf16-quantized ref: {jnp.max(jnp.abs(out2 - ref2_q))}")

    print("KERNEL_OK")
</pallas_src>

<mosaic_0001>
module attributes {stable_mosaic.version = 11 : i64} {
  func.func @fc_gelu_kernel(%arg0: i32, %arg1: memref<8x32xbf16, #tpu.memory_space<vmem>>, %arg2: memref<32x128xbf16, #tpu.memory_space<vmem>>, %arg3: memref<1x128xf32, #tpu.memory_space<vmem>>, %arg4: memref<8x128xf32, #tpu.memory_space<vmem>>) attributes {dimension_semantics = [#tpu.dimension_semantics<parallel>], iteration_bounds = array<i64: 1>, scalar_prefetch = 0 : i64, scratch_operands = 0 : i64, tpu.core_type = #tpu.core_type<tc>, window_params = [{transform_indices = @transform_0, window_bounds = array<i64: 8, 32>}, {pipeline_mode = #tpu.pipeline_mode<synchronous>, transform_indices = @transform_1, window_bounds = array<i64: 32, 128>}, {pipeline_mode = #tpu.pipeline_mode<synchronous>, transform_indices = @transform_2, window_bounds = array<i64: 1, 128>}, {transform_indices = @transform_3, window_bounds = array<i64: 8, 128>}]} {
    %c0 = arith.constant 0 : index
    %c0_0 = arith.constant 0 : index
    %0 = vector.load %arg1[%c0, %c0_0] : memref<8x32xbf16, #tpu.memory_space<vmem>>, vector<8x32xbf16>
    %c0_1 = arith.constant 0 : index
    %c0_2 = arith.constant 0 : index
    %1 = vector.load %arg2[%c0_1, %c0_2] : memref<32x128xbf16, #tpu.memory_space<vmem>>, vector<32x128xbf16>
    %cst = arith.constant dense<0.000000e+00> : vector<8x128xf32>
    %2 = tpu.matmul %0, %1, %cst {dimension_numbers = #tpu.dot_dimension_numbers<[1], [0], [0], [1], [0, 0, 1, 1], [], []>} : vector<8x32xbf16>, vector<32x128xbf16>, vector<8x128xf32> -> vector<8x128xf32>
    %c0_3 = arith.constant 0 : index
    %c0_4 = arith.constant 0 : index
    %3 = vector.load %arg3[%c0_3, %c0_4] : memref<1x128xf32, #tpu.memory_space<vmem>>, vector<1x128xf32>
    %4 = vector.broadcast %3 : vector<1x128xf32> to vector<8x128xf32>
    %5 = arith.addf %2, %4 : vector<8x128xf32>
    %cst_5 = arith.constant 5.000000e-01 : f32
    %6 = vector.broadcast %cst_5 : f32 to vector<8x128xf32>
    %7 = arith.mulf %6, %5 : vector<8x128xf32>
    %cst_6 = arith.constant 0.707106769 : f32
    %8 = vector.broadcast %cst_6 : f32 to vector<8x128xf32>
    %9 = arith.mulf %5, %8 : vector<8x128xf32>
    %10 = math.erf %9 : vector<8x128xf32>
    %cst_7 = arith.constant 1.000000e+00 : f32
    %11 = vector.broadcast %cst_7 : f32 to vector<8x128xf32>
    %12 = arith.addf %11, %10 : vector<8x128xf32>
    %13 = arith.mulf %7, %12 : vector<8x128xf32>
    %c0_8 = arith.constant 0 : index
    %c0_9 = arith.constant 0 : index
    %14 = vector.load %arg4[%c0_8, %c0_9] : memref<8x128xf32, #tpu.memory_space<vmem>>, vector<8x128xf32>
    tpu.vector_store %arg4[%c0_8, %c0_9], %13 {strides = array<i32>} : memref<8x128xf32, #tpu.memory_space<vmem>>, vector<8x128xf32>,
    return
  }
  func.func @transform_0(%arg0: i32) -> (i32, i32) {
    %c0_i32 = arith.constant 0 : i32
    %c0_i32_0 = arith.constant 0 : i32
    return %arg0, %c0_i32 : i32, i32
  }
  func.func @transform_1(%arg0: i32) -> (i32, i32) {
    %c0_i32 = arith.constant 0 : i32
    %c0_i32_0 = arith.constant 0 : i32
    %c0_i32_1 = arith.constant 0 : i32
    return %c0_i32, %c0_i32_0 : i32, i32
  }
  func.func @transform_2(%arg0: i32) -> (i32, i32) {
    %c0_i32 = arith.constant 0 : i32
    %c0_i32_0 = arith.constant 0 : i32
    %c0_i32_1 = arith.constant 0 : i32
    return %c0_i32, %c0_i32_0 : i32, i32
  }
  func.func @transform_3(%arg0: i32) -> (i32, i32) {
    %c0_i32 = arith.constant 0 : i32
    %c0_i32_0 = arith.constant 0 : i32
    return %arg0, %c0_i32 : i32, i32
  }
}

</mosaic_0001>

<llo_original>
// kernel: tpu_custom_call.1
$region0: #{tpu_custom_call.1}
  #allocation0 [shape = 'u32[]', space=smem, size = 0x4, offset = 0x4, fixed_abs, tag = 'smem constant byte address 0x4 - core index']
  #allocation1 [shape = 'u32[72,128]{1,0:T(1,128)}', space=vmem, size = 0x9000, scoped, tag = 'internal scratch']
  %s0 = inlined_call_operand.hbm [shape: bf16[8,32], index: 0, kind: input, shape index: {}]
  %s1 = inlined_call_operand.hbm [shape: bf16[32,128], index: 1, kind: input, shape index: {}]
  %s2 = inlined_call_operand.vmem [shape: f32[1,128], index: 2, kind: input, shape index: {}]
  %s3 = inlined_call_operand.hbm [shape: f32[8,128], index: 3, kind: output, shape index: {}]
  %s4 = sld [smem:[#allocation0]]
  $region30: #{tpu_custom_call.1} parent=0
    _
  %s6 = ssub.s32 1, %s4
  %s7 = scalar_select 0, %s6, %s4
  $region1: #{tpu_custom_call.1} parent=0
    #allocation2 [shape = 'u8[2048]{0}', space=vmem, size = 0x800, scoped, tag = 'input window, operand 0, single buffered']
    #allocation3 [shape = 's32[1]{0}', space=sflag, size = 0x4, scoped, tag = 'scoped memory for tpu_custom_call.1']
    #allocation4 [shape = 's32[1]{0}', space=sflag, size = 0x4, scoped, tag = 'scoped memory for tpu_custom_call.1']
    #allocation5 [shape = 'u8[8192]{0}', space=vmem, size = 0x2000, scoped, tag = 'input window, operand 1, single buffered']
    #allocation6 [shape = 's32[1]{0}', space=sflag, size = 0x4, scoped, tag = 'scoped memory for tpu_custom_call.1']
    #allocation7 [shape = 'u8[4096]{0}', space=vmem, size = 0x1000, scoped, tag = 'output window, operand 0, single buffered']
    %8 = vsyncpa [#allocation3], 0
    %9 = vsyncpa [#allocation6], 0
    %10 = vsyncpa [#allocation4], 0
    // Predicated region
    $region2: #{tpu_custom_call.1} parent=1 // pred_check
      _
    $region3: #{tpu_custom_call.1} parent=1 // pred_check_branch
      %12 = sbr.rel (0) target = $region5
    $region4: #{tpu_custom_call.1} parent=1 // pred_region
      %14 = vsyncadd [#allocation3], 0
      %s16 = sshll.u32 %s0, 4
      %s17 = int_to_ptr.hbm [resolvable:$true] %s16
      %s18 = sshll.u32 [#allocation2], 4
      %s19 = int_to_ptr.vmem [resolvable:$true] %s18
      %21 = dma.hbm_to_vmem [thread:$0]  %s17, 64, %s19, [#allocation3]
    $region5: #{tpu_custom_call.1} parent=1 // pred_fallthru
      _
    // Predicated region
    $region6: #{tpu_custom_call.1} parent=1 // pred_check
      _
    $region7: #{tpu_custom_call.1} parent=1 // pred_check_branch
      %23 = sbr.rel (0) target = $region9
    $region8: #{tpu_custom_call.1} parent=1 // pred_region
      %25 = vsyncadd [#allocation6], 0
      %s26 = sshll.u32 %s1, 4
      %s27 = int_to_ptr.hbm [resolvable:$true] %s26
      %s28 = sshll.u32 [#allocation5], 4
      %s29 = int_to_ptr.vmem [resolvable:$true] %s28
      %34 = dma.hbm_to_vmem [thread:$0]  %s27, 256, %s29, [#allocation6], 64, 64, 4
    $region9: #{tpu_custom_call.1} parent=1 // pred_fallthru
      _
    // Predicated region
    $region10: #{tpu_custom_call.1} parent=1 // pred_check
      _
    $region11: #{tpu_custom_call.1} parent=1 // pred_check_branch
      %36 = sbr.rel (0) target = $region13
    $region12: #{tpu_custom_call.1} parent=1 // pred_region
      _
    $region13: #{tpu_custom_call.1} parent=1 // pred_fallthru
      _
    // Predicated region
    $region14: #{tpu_custom_call.1} parent=1 // pred_check
      _
    $region15: #{tpu_custom_call.1} parent=1 // pred_check_branch
      %38 = sbr.rel (0) target = $region17
    $region16: #{tpu_custom_call.1} parent=1 // pred_region
      %40 = dma.done [#allocation3], 64
    $region17: #{tpu_custom_call.1} parent=1 // pred_fallthru
      _
    // Predicated region
    $region18: #{tpu_custom_call.1} parent=1 // pred_check
      _
    $region19: #{tpu_custom_call.1} parent=1 // pred_check_branch
      %42 = sbr.rel (0) target = $region21
    $region20: #{tpu_custom_call.1} parent=1 // pred_region
      %44 = dma.done [#allocation6], 256
    $region21: #{tpu_custom_call.1} parent=1 // pred_fallthru
      _
    %v46 = vld [vmem:[#allocation2] sm:$0xf]
    %v47 = vld [vmem:[#allocation5] sm:$0xf]
    %v48 = vld [vmem:[#allocation5 + $0x4] sm:$0xf]
    %v49 = vld [vmem:[#allocation5 + $0x8] sm:$0xf]
    %v50 = vld [vmem:[#allocation5 + $0xc] sm:$0xf]
    %v51 = vld [vmem:[%s2] sm:$0x1]
    %v53 = vperm.slane %v51, 0
    %v59 = vunpack.c.l.b16 %v47
    %v60 = vunpack.c.l.b16 %v48
    %v61 = vunpack.c.l.b16 %v49
    %v62 = vunpack.c.l.b16 %v50
    %v63 = vpack.c.b16 %v60, %v59
    %v64 = vpack.c.b16 %v62, %v61
    %vm67 = vcmask 261120
    %v69 = vsel %vm67, %v46, 0
    %71 = vmatpush.bf16.msra.mxu0 0
    %72 = vmatpush.bf16.msra.mxu0 0
    %73 = vmatpush.bf16.msra.mxu0 0
    %74 = vmatpush.bf16.msra.mxu0 0
    %75 = vmatpush.bf16.msra.mxu0 0
    %76 = vmatpush.bf16.msra.mxu0 0
    %77 = vmatpush.bf16.msra.mxu0 %v64
    %78 = vmatpush.bf16.msra.mxu0 %v63
    %79 = vmatmul.bf16.gmra.mxu0 %v69
    %v80 = vpop.f32.mrf.mxu0
    %v81 = vadd.f32 %v53, %v80
    %v82 = vpop.f32.mrf.mxu0
    %83 = vdwg.mxu0
    %v84 = vmul.f32 %v81, 0.5
    %v85 = vmul.f32 %v81, 0.70710677
    %v86 = vmul.f32 %v85, %v85
    %v87 = vmin.f32 16.0, %v86
    %v88 = vmul.f32 %v87, 2.1237322e-06
    %v89 = vadd.f32 %v88, 0.00028619796
    %v90 = vmul.f32 %v87, %v89
    %v91 = vadd.f32 %v90, 0.0036580483
    %v92 = vmul.f32 %v87, %v91
    %v93 = vadd.f32 %v92, 0.05243302
    %v94 = vmul.f32 %v87, %v93
    %v95 = vadd.f32 %v94, 0.18741608
    %v96 = vmul.f32 %v87, %v95
    %v97 = vadd.f32 %v96, 1.1283791
    %v98 = vmul.f32 %v85, %v97
    %v99 = vmul.f32 %v87, 3.8918573e-05
    %v100 = vadd.f32 %v99, 0.001143296
    %v101 = vmul.f32 %v87, %v100
    %v102 = vadd.f32 %v101, 0.014752088
    %v103 = vmul.f32 %v87, %v102
    %v104 = vadd.f32 %v103, 0.112945676
    %v105 = vmul.f32 %v87, %v104
    %v106 = vadd.f32 %v105, 0.4994258
    %v107 = vmul.f32 %v87, %v106
    %v108 = vadd.f32 %v107, 1.0
    %v109 = vrcp.pop %v108
    %v110 = vmul.f32 %v108, %v109
    %v111 = vsub.f32 1.0, %v110
    %v112 = vmul.f32 %v109, %v111
    %v113 = vadd.f32 %v109, %v112
    %vm114 = vweird.f32 %v108
    %vm115 = vweird.f32 %v109
    %vm116 = vmor %vm114, %vm115
    %v117 = vsel %vm116, %v109, %v113
    %v118 = vand.u32 2147483647, %v108
    %vm119 = vcmp.eq.f32.partialorder %v118, 8.507059e+37
    %v120 = vand.u32 %v108, 2147483648
    %v121 = vor.u32 1.1754944e-38, %v120
    %v122 = vsel %vm119, %v121, %v117
    %v123 = vmul.f32 %v98, %v122
    %v124 = vmin.f32 %v123, 1.0
    %v125 = vmax.f32 %v124, -1.0
    %v126 = vadd.f32 %v125, 1.0
    %v127 = vmul.f32 %v84, %v126
    %128 = vst [vmem:[#allocation7] sm:$0xff] %v127
    // Predicated region
    $region22: #{tpu_custom_call.1} parent=1 // pred_check
      _
    $region23: #{tpu_custom_call.1} parent=1 // pred_check_branch
      %130 = sbr.rel (0) target = $region25
    $region24: #{tpu_custom_call.1} parent=1 // pred_region
      %132 = vsyncadd [#allocation4], 0
      %s134 = sshll.u32 [#allocation7], 4
      %s135 = int_to_ptr.vmem [resolvable:$true] %s134
      %s136 = sshll.u32 %s3, 4
      %s137 = int_to_ptr.hbm [resolvable:$true] %s136
      %139 = dma.vmem_to_hbm [thread:$0]  %s135, 128, %s137, [#allocation4]
    $region25: #{tpu_custom_call.1} parent=1 // pred_fallthru
      _
    // Predicated region
    $region26: #{tpu_custom_call.1} parent=1 // pred_check
      _
    $region27: #{tpu_custom_call.1} parent=1 // pred_check_branch
      %141 = sbr.rel (0) target = $region29
    $region28: #{tpu_custom_call.1} parent=1 // pred_region
      %143 = dma.done [#allocation4], 128
    $region29: #{tpu_custom_call.1} parent=1 // pred_fallthru
      _
    %144 = vsyncpa [#allocation3], 1
    %145 = vsyncpa [#allocation6], 1
    %146 = vsyncpa [#allocation4], 1

</llo_original>
